<compile_context>
chip_gen: v5e
topology: v5e:2x2
jax: 0.10.0
libtpu: 0.0.40
codegen_flags: <defaults>
</compile_context>

<pallas_src>
import math
from functools import partial

import jax
import jax.numpy as jnp
from jax.experimental import pallas as pl
from jax.experimental.pallas import tpu as pltpu

_MIN_TM = 16


# --------------------------------------------------------------------------- #
# Kernels
# --------------------------------------------------------------------------- #
def _similarity_kernel(x_ref, y_ref, o_ref, *, scale):
    # Upcast BEFORE the multiply so the product (not just the sum) is f32; the
    # kernel is HBM-bound with huge VPU slack, so the casts are free.
    x = x_ref[...].astype(jnp.float32)
    y = y_ref[...].astype(jnp.float32)
    res = jnp.sum(x * y, axis=-1, keepdims=True)
    if scale != 1.0:
        res = res * jnp.float32(scale)
    o_ref[...] = res.astype(o_ref.dtype)


def _similarity_kernel_dtiled(x_ref, y_ref, o_ref, acc_ref, *, scale, d_total, tk):
    # D-tiled variant: f32 VMEM accumulator across the (arbitrary) D grid axis.
    k = pl.program_id(1)

    @pl.when(k == 0)
    def _():
        acc_ref[...] = jnp.zeros_like(acc_ref)

    prod = x_ref[...].astype(jnp.float32) * y_ref[...].astype(jnp.float32)
    if d_total % tk != 0:
        # Final partial D tile reads undefined columns; keep them out of the
        # accumulator (they may carry NaN/Inf bit patterns).
        col = jax.lax.broadcasted_iota(jnp.int32, prod.shape, 1)
        prod = jnp.where(k * tk + col < d_total, prod, 0.0)
    acc_ref[...] += jnp.sum(prod, axis=-1, keepdims=True)

    @pl.when(k == pl.num_programs(1) - 1)
    def _():
        res = acc_ref[...]
        if scale != 1.0:
            res = res * jnp.float32(scale)
        o_ref[...] = res.astype(o_ref.dtype)


# --------------------------------------------------------------------------- #
# Tiling helpers
# --------------------------------------------------------------------------- #
def _vmem_limit_bytes():
    """Scoped-VMEM limit: above the 16/32 MiB defaults, headroom below physical
    capacity (64 MiB per TensorCore on v7x, 128 MiB on v5e/v6e)."""
    cap = None
    try:
        cap = int(pltpu.get_tpu_info().vmem_capacity_bytes)
    except Exception:
        cap = None
    if not cap:
        kind = ""
        try:
            kind = jax.devices()[0].device_kind.lower()
        except Exception:
            pass
        # Only assume the small (v7x) capacity when the device really is v7x.
        cap = (64 << 20) if ("v7" in kind or "7x" in kind) else (128 << 20)
    return int(min(max(cap - (16 << 20), 32 << 20), 100 << 20))


def _pick_tm(n_rows, per_row_bytes, budget):
    """Largest row tile (<= 1024) fitting the double-buffered VMEM budget, with
    >= 8 grid steps (pipeline depth + v7x 2-TC sharding) when rows allow, and a
    preference for an even number of grid steps."""
    tm = budget // max(per_row_bytes, 1)
    tm = max(_MIN_TM, min(tm, 1024))          # 512-1024 rows ~ 85% of HBM roofline
    if n_rows > 8 * _MIN_TM:
        tm = min(tm, max(_MIN_TM, -(-n_rows // 8)))
    if n_rows <= tm:
        return int(n_rows)                    # block dims == array dims is legal
    tm = (tm // 128) * 128 if tm >= 128 else (tm // _MIN_TM) * _MIN_TM
    tm = max(_MIN_TM, tm)
    steps = -(-n_rows // tm)
    if steps % 2:                             # balance v7x's two TensorCores
        cand = -(-n_rows // (steps + 1))
        cand = (cand // 128) * 128 if cand >= 128 else (cand // _MIN_TM) * _MIN_TM
        if cand >= _MIN_TM and (-(-n_rows // cand)) % 2 == 0:
            tm = cand
    return int(tm)


def _broadcast_tile(m, cap):
    """Largest tile <= cap that divides m (so repeated-operand blocks never
    straddle a repeat boundary) and is a multiple of 8 (sublane-legal for the
    full-size operand). None if no such tile exists."""
    t = (min(cap, m) // 8) * 8
    while t >= 8:
        if m % t == 0:
            return int(t)
        t -= 8
    return None


def _row_index_map(rows, tm, n_rows, d_tiled):
    """Row-block index map. Operands with fewer rows than the broadcast result
    are indexed modulo their own block count (no HBM materialization)."""
    if rows == n_rows:
        return (lambda i, k: (i, k)) if d_tiled else (lambda i: (i, 0))
    steps = rows // tm
    return (lambda i, k: (i % steps, k)) if d_tiled else (lambda i: (i % steps, 0))


def _prepare_operands(tensor_1, tensor_2):
    """Flatten both operands to 2-D (rows, D) while avoiding HBM materialization
    of leading-dim broadcasts."""
    s1, s2 = tuple(tensor_1.shape), tuple(tensor_2.shape)
    bshape = tuple(jnp.broadcast_shapes(s1, s2))
    D = bshape[-1]
    lead = bshape[:-1]
    N = int(math.prod(lead)) if lead else 1

    def rows_of(shape):
        return int(math.prod(shape[:-1])) if len(shape) > 1 else 1

    def suffix_rows(shape):
        # Row count if `shape` (after dropping leading size-1 dims) is a trailing
        # slice of the broadcast shape; else None.
        s = list(shape)
        while len(s) > 1 and s[0] == 1:
            s.pop(0)
        s = tuple(s)
        if s[-1] != D:
            return None
        if len(s) <= len(bshape) and s == bshape[len(bshape) - len(s):]:
            return rows_of(s)
        return None

    # Fast path: identical shapes -> no broadcast at all.
    if s1 == s2:
        return tensor_1.reshape(N, D), tensor_2.reshape(N, D), lead, N, D, 1, 1

    r2 = suffix_rows(s2)
    if s1 == bshape and r2:
        return (tensor_1.reshape(N, D), tensor_2.reshape(r2, D),
                lead, N, D, 1, N // r2)
    r1 = suffix_rows(s1)
    if s2 == bshape and r1:
        return (tensor_1.reshape(r1, D), tensor_2.reshape(N, D),
                lead, N, D, N // r1, 1)

    # General broadcasting (interior size-1 expansion, last-dim broadcast, ...):
    # rare; fall back to materializing.
    t1, t2 = jnp.broadcast_arrays(tensor_1, tensor_2)
    return t1.reshape(N, D), t2.reshape(N, D), lead, N, D, 1, 1


# --------------------------------------------------------------------------- #
# Public wrapper
# --------------------------------------------------------------------------- #
def similarity_function(tensor_1, tensor_2, scale_output=False, *, tm=None):
    """Dot product along the last axis of two broadcast-compatible tensors.
    Returns an array of shape broadcast(tensor_1, tensor_2).shape[:-1]."""
    tensor_1 = jnp.asarray(tensor_1)
    tensor_2 = jnp.asarray(tensor_2)
    out_dtype = jnp.result_type(tensor_1.dtype, tensor_2.dtype)
    scale = math.sqrt(tensor_1.shape[-1]) if scale_output else 1.0

    x, y, lead, N, D, rep_x, rep_y = _prepare_operands(tensor_1, tensor_2)
    if N == 0 or D == 0:
        return jnp.zeros(lead, dtype=out_dtype)

    itemsize = max(jnp.dtype(tensor_1.dtype).itemsize,
                   jnp.dtype(tensor_2.dtype).itemsize)
    vmem_limit = _vmem_limit_bytes()
    budget = (3 * vmem_limit) // 4            # headroom for output/metadata
    lanes_full = -(-D // 128) * 128           # VMEM pads the lane dim to 128
    per_row_full = 4 * lanes_full * itemsize  # 2 inputs x 2 pipeline buffers

    # D-tiling only when even small row tiles blow the VMEM budget (huge D):
    # keeps tm >= ~512 and avoids v7x-only OOM at D where v5e/v6e still fit.
    use_d_tiling = (budget // per_row_full) < min(256, N)
    if use_d_tiling:
        tk = ((budget // (4 * itemsize * 512)) // 128) * 128
        tk = int(max(128, min(tk, lanes_full)))
        per_row = 4 * tk * itemsize
    else:
        tk = None
        per_row = per_row_full

    if tm is None:
        tm = _pick_tm(N, per_row, budget)
    tm = int(min(tm, N))

    # Leading-dim broadcast: the row tile must divide the repeated operand's row
    # count so its (modulo-indexed) blocks never straddle a repeat boundary.
    if rep_x > 1 or rep_y > 1:
        m_small = x.shape[0] if rep_x > 1 else y.shape[0]
        tm_b = _broadcast_tile(m_small, tm)
        if tm_b is None:
            # Rare (tiny / non-8-divisible repeat period): materialize instead.
            if rep_x > 1:
                x, rep_x = jnp.tile(x, (rep_x, 1)), 1
            else:
                y, rep_y = jnp.tile(y, (rep_y, 1)), 1
        else:
            tm = tm_b

    if use_d_tiling:
        grid = (pl.cdiv(N, tm), pl.cdiv(D, tk))
        in_specs = [pl.BlockSpec((tm, tk), _row_index_map(x.shape[0], tm, N, True)),
                    pl.BlockSpec((tm, tk), _row_index_map(y.shape[0], tm, N, True))]
        out_specs = pl.BlockSpec((tm, 1), lambda i, k: (i, 0))
        kernel = partial(_similarity_kernel_dtiled, scale=scale, d_total=D, tk=tk)
        scratch = [pltpu.VMEM((tm, 1), jnp.float32)]
        dim_sem = ("parallel", "arbitrary")
    else:
        grid = (pl.cdiv(N, tm),)              # no input padding; partial last block
        in_specs = [pl.BlockSpec((tm, D), _row_index_map(x.shape[0], tm, N, False)),
                    pl.BlockSpec((tm, D), _row_index_map(y.shape[0], tm, N, False))]
        out_specs = pl.BlockSpec((tm, 1), lambda i: (i, 0))
        kernel = partial(_similarity_kernel, scale=scale)
        scratch = []
        # TODO(synk): if ("parallel",) does not shard this single axis across
        # v7x's 2 TensorCores, add a leading size-2 grid axis / CORE_PARALLEL.
        dim_sem = ("parallel",)

    out = pl.pallas_call(
        kernel,
        out_shape=jax.ShapeDtypeStruct((N, 1), out_dtype),
        grid_spec=pltpu.PrefetchScalarGridSpec(
            num_scalar_prefetch=0,
            grid=grid,
            in_specs=in_specs,
            out_specs=out_specs,
            scratch_shapes=scratch,
        ),
        compiler_params=pltpu.CompilerParams(
            dimension_semantics=dim_sem,
            vmem_limit_bytes=vmem_limit,
        ),
    )(x, y)

    return out.reshape(lead)


# --------------------------------------------------------------------------- #
# Self-test
# --------------------------------------------------------------------------- #
if __name__ == "__main__":
    key = jax.random.PRNGKey(0)
    k1, k2, k3, k4 = jax.random.split(key, 4)

    # Cases 1/2: batch=2, seq=8, hidden=32, both scale_output settings.
    B, S, D = 2, 8, 32
    t1 = jax.random.normal(k1, (B, S, D), dtype=jnp.float32)
    t2 = jax.random.normal(k2, (B, S, D), dtype=jnp.float32)
    ref = jnp.sum(t1 * t2, axis=-1)

    out = jax.block_until_ready(similarity_function(t1, t2, scale_output=False))
    assert out.shape == (B, S)
    assert jnp.allclose(out, ref, atol=1e-5, rtol=1e-5)

    out_s = jax.block_until_ready(similarity_function(t1, t2, scale_output=True))
    assert jnp.allclose(out_s, ref * math.sqrt(D), atol=1e-4, rtol=1e-5)

    # Case 3: rows not a multiple of the tile -> multi-step grid with a partial
    # final block (forced small tm); exercises the padding-free cdiv path.
    t3 = jax.random.normal(k3, (4, 5, D), dtype=jnp.float32)   # N = 20 rows
    t4 = jax.random.normal(k4, (4, 5, D), dtype=jnp.float32)
    out3 = jax.block_until_ready(similarity_function(t3, t4, tm=16))
    assert out3.shape == (4, 5)
    assert jnp.allclose(out3, jnp.sum(t3 * t4, axis=-1), atol=1e-5, rtol=1e-5)

    # Case 4: leading-dim broadcasting — expressed via modulo index_map, the
    # small operand is NOT materialized to (B, S, D) in HBM.
    t5 = t2[0]                                                 # (S, D) vs (B, S, D)
    out4 = jax.block_until_ready(similarity_function(t1, t5))
    assert out4.shape == (B, S)
    assert jnp.allclose(out4, jnp.sum(t1 * t5, axis=-1), atol=1e-5, rtol=1e-5)

    # Case 5: bf16 inputs — product and accumulation happen in f32 in-kernel.
    t1b = t1.astype(jnp.bfloat16)
    t2b = t2.astype(jnp.bfloat16)
    refb = jnp.sum(t1b.astype(jnp.float32) * t2b.astype(jnp.float32), axis=-1)
    outb = jax.block_until_ready(similarity_function(t1b, t2b))
    assert outb.dtype == jnp.bfloat16
    assert jnp.allclose(outb.astype(jnp.float32), refb, atol=5e-2, rtol=2e-2)

    print("KERNEL_OK")
</pallas_src>

<mosaic_0001>
module attributes {stable_mosaic.version = 11 : i64} {
  func.func @_similarity_kernel(%arg0: i32, %arg1: memref<16x32xf32, #tpu.memory_space<vmem>>, %arg2: memref<16x32xf32, #tpu.memory_space<vmem>>, %arg3: memref<16x1xf32, #tpu.memory_space<vmem>>) attributes {dimension_semantics = [#tpu.dimension_semantics<parallel>], iteration_bounds = array<i64: 1>, scalar_prefetch = 0 : i64, scratch_operands = 0 : i64, tpu.core_type = #tpu.core_type<tc>, window_params = [{transform_indices = @transform_0, window_bounds = array<i64: 16, 32>}, {transform_indices = @transform_1, window_bounds = array<i64: 16, 32>}, {transform_indices = @transform_2, window_bounds = array<i64: 16, 1>}]} {
    %c0 = arith.constant 0 : index
    %c0_0 = arith.constant 0 : index
    %0 = vector.load %arg1[%c0, %c0_0] : memref<16x32xf32, #tpu.memory_space<vmem>>, vector<16x32xf32>
    %c0_1 = arith.constant 0 : index
    %c0_2 = arith.constant 0 : index
    %1 = vector.load %arg2[%c0_1, %c0_2] : memref<16x32xf32, #tpu.memory_space<vmem>>, vector<16x32xf32>
    %2 = arith.mulf %0, %1 : vector<16x32xf32>
    %cst = arith.constant dense<0.000000e+00> : vector<16xf32>
    %3 = vector.multi_reduction <add>, %2, %cst [1] : vector<16x32xf32> to vector<16xf32>
    %4 = vector.shape_cast %3 : vector<16xf32> to vector<16x1xf32>
    %c0_3 = arith.constant 0 : index
    %c0_4 = arith.constant 0 : index
    %5 = vector.load %arg3[%c0_3, %c0_4] : memref<16x1xf32, #tpu.memory_space<vmem>>, vector<16x1xf32>
    tpu.vector_store %arg3[%c0_3, %c0_4], %4 {strides = array<i32>} : memref<16x1xf32, #tpu.memory_space<vmem>>, vector<16x1xf32>,
    return
  }
  func.func @transform_0(%arg0: i32) -> (i32, i32) {
    %c0_i32 = arith.constant 0 : i32
    %c0_i32_0 = arith.constant 0 : i32
    return %arg0, %c0_i32 : i32, i32
  }
  func.func @transform_1(%arg0: i32) -> (i32, i32) {
    %c0_i32 = arith.constant 0 : i32
    %c0_i32_0 = arith.constant 0 : i32
    return %arg0, %c0_i32 : i32, i32
  }
  func.func @transform_2(%arg0: i32) -> (i32, i32) {
    %c0_i32 = arith.constant 0 : i32
    %c0_i32_0 = arith.constant 0 : i32
    return %arg0, %c0_i32 : i32, i32
  }
}

</mosaic_0001>

<llo_original>
// kernel: tpu_custom_call.1
$region0: #{tpu_custom_call.1}
  #allocation0 [shape = 'u32[]', space=smem, size = 0x4, offset = 0x4, fixed_abs, tag = 'smem constant byte address 0x4 - core index']
  #allocation1 [shape = 'u32[72,128]{1,0:T(1,128)}', space=vmem, size = 0x9000, scoped, tag = 'internal scratch']
  %s0 = inlined_call_operand.hbm [shape: f32[16,32], index: 0, kind: input, shape index: {}]
  %s1 = inlined_call_operand.hbm [shape: f32[16,32], index: 1, kind: input, shape index: {}]
  %s2 = inlined_call_operand.vmem [shape: f32[16,1], index: 2, kind: output, shape index: {}]
  %s3 = sld [smem:[#allocation0]]
  $region26: #{tpu_custom_call.1} parent=0
    _
  %s5 = ssub.s32 1, %s3
  %s6 = scalar_select 0, %s5, %s3
  $region1: #{tpu_custom_call.1} parent=0
    #allocation2 [shape = 'u8[8192]{0}', space=vmem, size = 0x2000, scoped, tag = 'input window, operand 0, single buffered']
    #allocation3 [shape = 's32[1]{0}', space=sflag, size = 0x4, scoped, tag = 'scoped memory for tpu_custom_call.1']
    #allocation4 [shape = 'u8[8192]{0}', space=vmem, size = 0x2000, scoped, tag = 'input window, operand 1, single buffered']
    #allocation5 [shape = 's32[1]{0}', space=sflag, size = 0x4, scoped, tag = 'scoped memory for tpu_custom_call.1']
    %7 = vsyncpa [#allocation3], 0
    %8 = vsyncpa [#allocation5], 0
    // Predicated region
    $region2: #{tpu_custom_call.1} parent=1 // pred_check
      _
    $region3: #{tpu_custom_call.1} parent=1 // pred_check_branch
      %10 = sbr.rel (0) target = $region5
    $region4: #{tpu_custom_call.1} parent=1 // pred_region
      %12 = vsyncadd [#allocation3], 0
      %s13 = sshll.u32 %s0, 4
      %s14 = int_to_ptr.hbm [resolvable:$true] %s13
      %s15 = sshll.u32 [#allocation2], 4
      %s16 = int_to_ptr.vmem [resolvable:$true] %s15
      %21 = dma.hbm_to_vmem [thread:$0]  %s14, 256, %s16, [#allocation3], 128, 128, 8
    $region5: #{tpu_custom_call.1} parent=1 // pred_fallthru
      _
    // Predicated region
    $region6: #{tpu_custom_call.1} parent=1 // pred_check
      _
    $region7: #{tpu_custom_call.1} parent=1 // pred_check_branch
      %23 = sbr.rel (0) target = $region9
    $region8: #{tpu_custom_call.1} parent=1 // pred_region
      %25 = vsyncadd [#allocation5], 0
      %s26 = sshll.u32 %s1, 4
      %s27 = int_to_ptr.hbm [resolvable:$true] %s26
      %s28 = sshll.u32 [#allocation4], 4
      %s29 = int_to_ptr.vmem [resolvable:$true] %s28
      %34 = dma.hbm_to_vmem [thread:$0]  %s27, 256, %s29, [#allocation5], 128, 128, 8
    $region9: #{tpu_custom_call.1} parent=1 // pred_fallthru
      _
    // Predicated region
    $region10: #{tpu_custom_call.1} parent=1 // pred_check
      _
    $region11: #{tpu_custom_call.1} parent=1 // pred_check_branch
      %36 = sbr.rel (0) target = $region13
    $region12: #{tpu_custom_call.1} parent=1 // pred_region
      %38 = dma.done [#allocation3], 256
    $region13: #{tpu_custom_call.1} parent=1 // pred_fallthru
      _
    // Predicated region
    $region14: #{tpu_custom_call.1} parent=1 // pred_check
      _
    $region15: #{tpu_custom_call.1} parent=1 // pred_check_branch
      %40 = sbr.rel (0) target = $region17
    $region16: #{tpu_custom_call.1} parent=1 // pred_region
      %42 = dma.done [#allocation5], 256
    $region17: #{tpu_custom_call.1} parent=1 // pred_fallthru
      _
    %v43 = vld [vmem:[#allocation2] sm:$0xff]
    %v44 = vld [vmem:[#allocation2 + $0x8] sm:$0xff]
    %v45 = vld [vmem:[#allocation4] sm:$0xff]
    %v46 = vld [vmem:[#allocation4 + $0x8] sm:$0xff]
    %v47 = vmul.f32 %v43, %v45
    %v48 = vmul.f32 %v44, %v46
    %vm49 = vcmask 261120
    %v50 = vsel %vm49, %v47, 0.0
    %51 = vadd.xlane.f32.xlu0 %v50
    %v52 = vpop.xlane.xlu0 %51
    %v53 = vsel %vm49, %v48, 0.0
    %54 = vadd.xlane.f32.xlu0 %v53
    %v55 = vpop.xlane.xlu0 %54
    %vm56 = vcmask 7168
    %57 = vst.msk [vmem:[%s2] sm:$0xff] %vm56, %v52
    %58 = vst.msk [vmem:[%s2 + $0x8] sm:$0xff] %vm56, %v55
    // Predicated region
    $region18: #{tpu_custom_call.1} parent=1 // pred_check
      _
    $region19: #{tpu_custom_call.1} parent=1 // pred_check_branch
      %60 = sbr.rel (0) target = $region21
    $region20: #{tpu_custom_call.1} parent=1 // pred_region
      _
    $region21: #{tpu_custom_call.1} parent=1 // pred_fallthru
      _
    // Predicated region
    $region22: #{tpu_custom_call.1} parent=1 // pred_check
      _
    $region23: #{tpu_custom_call.1} parent=1 // pred_check_branch
      %62 = sbr.rel (0) target = $region25
    $region24: #{tpu_custom_call.1} parent=1 // pred_region
      _
    $region25: #{tpu_custom_call.1} parent=1 // pred_fallthru
      _
    %63 = vsyncpa [#allocation3], 1
    %64 = vsyncpa [#allocation5], 1

</llo_original>
